<compile_context>
chip_gen: v5e
topology: v5e:2x2
jax: 0.10.0
libtpu: 0.0.40
codegen_flags: <defaults>
</compile_context>

<pallas_src>
import functools

import jax
import jax.numpy as jnp
from jax import lax
from jax.experimental import pallas as pl
from jax.experimental.pallas import tpu as pltpu

LANE = 128  # lane-dense width for the padded classifier output


# ----------------------------------------------------------------------------
# Fused kernel: hoisted input projection -> tanh-RNN recurrence with
# length-masked max pooling -> Linear/Tanh/Linear/Tanh/Linear classifier.
# No grid, no scratch: everything (a few KiB) lives in vregs/VMEM for the
# whole call.
# ----------------------------------------------------------------------------
def rnn_fused_kernel(len_ref, x_ref, wih_ref, whh_ref, bias_ref,
                     w1_ref, b1_ref, w2_ref, b2_ref, w3_ref, b3_ref,
                     out_ref):
    B = len_ref.shape[0]
    TB = x_ref.shape[0]
    T = TB // B
    H = whh_ref.shape[1]

    # ---- hoisted input projection: one MXU pass over all timesteps -------
    xproj = (jnp.dot(x_ref[...], wih_ref[...],
                     preferred_element_type=jnp.float32)
             + bias_ref[...])                              # (T*B, H), in regs

    lens = len_ref[...]                                    # (B, 1) int32
    whh = whh_ref[...]                                     # (H, H)

    # ---- sequential tanh recurrence + length-masked max pooling ----------
    # T is a static Python int (tiny), so the loop is fully unrolled at trace
    # time and every slice below is static -> no dynamic-slice lowering, no
    # VMEM scratch round-trip; h/pool stay resident in vregs.
    h = jnp.zeros((B, H), jnp.float32)
    pool = jnp.full((B, H), -jnp.inf, jnp.float32)
    for t in range(T):
        xp = lax.slice(xproj, (t * B, 0), ((t + 1) * B, H))   # (B, H) static
        h = jnp.tanh(xp + jnp.dot(h, whh,
                                  preferred_element_type=jnp.float32))
        # pad_packed_sequence zero-fills t >= sent_len[b]; max pooling then
        # runs over those zeros too.
        pool = jnp.maximum(pool, jnp.where(t < lens, h, 0.0))

    # ---- fused classifier (dropout p=0 is the identity and is omitted) ---
    h1 = jnp.tanh(jnp.dot(pool, w1_ref[...],
                          preferred_element_type=jnp.float32) + b1_ref[...])
    h2 = jnp.tanh(jnp.dot(h1, w2_ref[...],
                          preferred_element_type=jnp.float32) + b2_ref[...])
    out_ref[...] = (jnp.dot(h2, w3_ref[...],
                            preferred_element_type=jnp.float32) + b3_ref[...])


# ----------------------------------------------------------------------------
# One-time (outside jit) weight re-layout: transpose, fold the two RNN biases,
# and zero-pad the final projection to a lane-dense 128-wide slab.
# ----------------------------------------------------------------------------
def prepare_params(params, lane_pad=LANE):
    H = params["w_hh"].shape[0]
    F = params["fc1_w"].shape[0]
    C = params["fc3_w"].shape[0]
    cp = max(lane_pad, C)
    w3_t = jnp.zeros((F, cp), jnp.float32).at[:, :C].set(
        jnp.transpose(params["fc3_w"]))
    b3_p = jnp.zeros((1, cp), jnp.float32).at[:, :C].set(
        params["fc3_b"].reshape(1, -1))
    return {
        "wih_t": jnp.transpose(params["w_ih"]),                 # (E, H)
        "whh_t": jnp.transpose(params["w_hh"]),                 # (H, H)
        "bias": (params["b_ih"] + params["b_hh"]).reshape(1, H),
        "fc1_t": jnp.transpose(params["fc1_w"]),                # (H, F)
        "fc1_b": params["fc1_b"].reshape(1, -1),
        "fc2_t": jnp.transpose(params["fc2_w"]),                # (F, F)
        "fc2_b": params["fc2_b"].reshape(1, -1),
        "fc3_t": w3_t,                                          # (F, 128)
        "fc3_b": b3_p,                                          # (1, 128)
    }


# ----------------------------------------------------------------------------
# Full module forward (s2 is None -> features = encoder(s1)).
# ----------------------------------------------------------------------------
@functools.partial(jax.jit, static_argnames=("n_classes",))
def rnn_module_forward(sent, sent_len, prep, *, n_classes):
    T, B, E = sent.shape
    H = prep["whh_t"].shape[0]
    F = prep["fc1_t"].shape[1]
    CP = prep["fc3_t"].shape[1]

    x2d = sent.reshape(T * B, E)                      # free metadata reshape
    lens = sent_len.astype(jnp.int32).reshape(B, 1)

    flops = (2 * T * B * E * H          # input projection
             + 2 * T * B * H * H        # recurrence
             + 2 * B * (H * F + F * F + F * CP))      # classifier
    transcendentals = T * B * H + 2 * B * F           # tanh
    bytes_accessed = 4 * (T * B * E + B + E * H + H * H + H
                          + H * F + F + F * F + F + F * CP + CP + B * CP)

    out_padded = pl.pallas_call(
        rnn_fused_kernel,
        out_shape=jax.ShapeDtypeStruct((B, CP), jnp.float32),
        cost_estimate=pl.CostEstimate(flops=flops,
                                      transcendentals=transcendentals,
                                      bytes_accessed=bytes_accessed),
    )(lens, x2d,
      prep["wih_t"], prep["whh_t"], prep["bias"],
      prep["fc1_t"], prep["fc1_b"],
      prep["fc2_t"], prep["fc2_b"],
      prep["fc3_t"], prep["fc3_b"])

    return out_padded[:, :n_classes]


# ----------------------------------------------------------------------------
# Parameter init (PyTorch defaults) and a pure-JAX reference for validation.
# ----------------------------------------------------------------------------
def init_params(key, word_embed_dim, encoder_dim, fc_dim, n_classes):
    ks = jax.random.split(key, 10)

    def uniform(k, shape, fan):
        bound = 1.0 / jnp.sqrt(fan)
        return jax.random.uniform(k, shape, jnp.float32, -bound, bound)

    H, E, F, C = encoder_dim, word_embed_dim, fc_dim, n_classes
    return {
        "w_ih": uniform(ks[0], (H, E), H),
        "w_hh": uniform(ks[1], (H, H), H),
        "b_ih": uniform(ks[2], (H,), H),
        "b_hh": uniform(ks[3], (H,), H),
        "fc1_w": uniform(ks[4], (F, H), H),
        "fc1_b": uniform(ks[5], (F,), H),
        "fc2_w": uniform(ks[6], (F, F), F),
        "fc2_b": uniform(ks[7], (F,), F),
        "fc3_w": uniform(ks[8], (C, F), F),
        "fc3_b": uniform(ks[9], (C,), F),
    }


def reference_forward(sent, sent_len, params):
    T, B, _ = sent.shape
    H = params["w_hh"].shape[0]
    lens = sent_len.astype(jnp.int32).reshape(B, 1)
    h = jnp.zeros((B, H), jnp.float32)
    pool = jnp.full((B, H), -jnp.inf, jnp.float32)
    for t in range(T):
        h = jnp.tanh(sent[t] @ params["w_ih"].T + params["b_ih"]
                     + h @ params["w_hh"].T + params["b_hh"])
        pool = jnp.maximum(pool, jnp.where(t < lens, h, 0.0))
    h1 = jnp.tanh(pool @ params["fc1_w"].T + params["fc1_b"])
    h2 = jnp.tanh(h1 @ params["fc2_w"].T + params["fc2_b"])
    return h2 @ params["fc3_w"].T + params["fc3_b"]


if __name__ == "__main__":
    T, B = 8, 8                     # B=8 -> sublane-dense tiles for free
    word_embed_dim, encoder_dim, fc_dim, n_classes = 32, 32, 64, 3

    key = jax.random.PRNGKey(0)
    k_sent, k_params = jax.random.split(key)

    sent = jax.random.normal(k_sent, (T, B, word_embed_dim), jnp.float32)
    sent_len = jnp.array([T, 5, T, 3, 7, 1, 6, 2], dtype=jnp.int32)  # max == T
    params = init_params(k_params, word_embed_dim, encoder_dim, fc_dim,
                         n_classes)
    prep = prepare_params(params)   # one-time weight re-layout, outside jit

    out = rnn_module_forward(sent, sent_len, prep, n_classes=n_classes)
    jax.block_until_ready(out)

    assert out.shape == (B, n_classes) and out.dtype == jnp.float32
    ref = reference_forward(sent, sent_len, params)
    # loose tolerance: MXU f32 dot precision may differ slightly between the
    # Pallas kernel and the XLA reference path
    assert bool(jnp.all(jnp.isfinite(out)))
    assert bool(jnp.allclose(out, ref, atol=1e-2, rtol=1e-2))
    print("KERNEL_OK")
</pallas_src>

<mosaic_0001>
module attributes {stable_mosaic.version = 11 : i64} {
  func.func @rnn_fused_kernel(%arg0: memref<8x1xi32, #tpu.memory_space<vmem>>, %arg1: memref<64x32xf32, #tpu.memory_space<vmem>>, %arg2: memref<32x32xf32, #tpu.memory_space<vmem>>, %arg3: memref<32x32xf32, #tpu.memory_space<vmem>>, %arg4: memref<1x32xf32, #tpu.memory_space<vmem>>, %arg5: memref<32x64xf32, #tpu.memory_space<vmem>>, %arg6: memref<1x64xf32, #tpu.memory_space<vmem>>, %arg7: memref<64x64xf32, #tpu.memory_space<vmem>>, %arg8: memref<1x64xf32, #tpu.memory_space<vmem>>, %arg9: memref<64x128xf32, #tpu.memory_space<vmem>>, %arg10: memref<1x128xf32, #tpu.memory_space<vmem>>, %arg11: memref<8x128xf32, #tpu.memory_space<vmem>>) attributes {dimension_semantics = [], scalar_prefetch = 0 : i64, scratch_operands = 0 : i64, tpu.core_type = #tpu.core_type<tc>} {
    %c0 = arith.constant 0 : index
    %c0_0 = arith.constant 0 : index
    %0 = vector.load %arg1[%c0, %c0_0] : memref<64x32xf32, #tpu.memory_space<vmem>>, vector<64x32xf32>
    %c0_1 = arith.constant 0 : index
    %c0_2 = arith.constant 0 : index
    %1 = vector.load %arg2[%c0_1, %c0_2] : memref<32x32xf32, #tpu.memory_space<vmem>>, vector<32x32xf32>
    %cst = arith.constant dense<0.000000e+00> : vector<64x32xf32>
    %2 = tpu.matmul %0, %1, %cst {dimension_numbers = #tpu.dot_dimension_numbers<[1], [0], [0], [1], [0, 0, 1, 1], [], []>} : vector<64x32xf32>, vector<32x32xf32>, vector<64x32xf32> -> vector<64x32xf32>
    %c0_3 = arith.constant 0 : index
    %c0_4 = arith.constant 0 : index
    %3 = vector.load %arg4[%c0_3, %c0_4] : memref<1x32xf32, #tpu.memory_space<vmem>>, vector<1x32xf32>
    %4 = vector.broadcast %3 : vector<1x32xf32> to vector<64x32xf32>
    %5 = arith.addf %2, %4 : vector<64x32xf32>
    %c0_5 = arith.constant 0 : index
    %c0_6 = arith.constant 0 : index
    %6 = vector.load %arg0[%c0_5, %c0_6] : memref<8x1xi32, #tpu.memory_space<vmem>>, vector<8x1xi32>
    %c0_7 = arith.constant 0 : index
    %c0_8 = arith.constant 0 : index
    %7 = vector.load %arg3[%c0_7, %c0_8] : memref<32x32xf32, #tpu.memory_space<vmem>>, vector<32x32xf32>
    %cst_9 = arith.constant 0.000000e+00 : f32
    %8 = vector.broadcast %cst_9 : f32 to vector<8x32xf32>
    %cst_10 = arith.constant 0xFF800000 : f32
    %9 = vector.broadcast %cst_10 : f32 to vector<8x32xf32>
    %10 = vector.extract_strided_slice %5 {offsets = [0, 0], sizes = [8, 32], strides = [1, 1]} : vector<64x32xf32> to vector<8x32xf32>
    %cst_11 = arith.constant dense<0.000000e+00> : vector<8x32xf32>
    %11 = tpu.matmul %8, %7, %cst_11 {dimension_numbers = #tpu.dot_dimension_numbers<[1], [0], [0], [1], [0, 0, 1, 1], [], []>} : vector<8x32xf32>, vector<32x32xf32>, vector<8x32xf32> -> vector<8x32xf32>
    %12 = arith.addf %10, %11 : vector<8x32xf32>
    %13 = math.tanh %12 : vector<8x32xf32>
    %c0_i32 = arith.constant 0 : i32
    %14 = vector.broadcast %c0_i32 : i32 to vector<8x1xi32>
    %15 = arith.cmpi sgt, %6, %14 : vector<8x1xi32>
    %cst_12 = arith.constant 0.000000e+00 : f32
    %16 = vector.shape_cast %15 : vector<8x1xi1> to vector<8x1xi1>
    %17 = vector.broadcast %16 : vector<8x1xi1> to vector<8x32xi1>
    %18 = vector.broadcast %cst_12 : f32 to vector<8x32xf32>
    %19 = arith.select %17, %13, %18 : vector<8x32xi1>, vector<8x32xf32>
    %20 = arith.maximumf %9, %19 : vector<8x32xf32>
    %21 = vector.extract_strided_slice %5 {offsets = [8, 0], sizes = [8, 32], strides = [1, 1]} : vector<64x32xf32> to vector<8x32xf32>
    %cst_13 = arith.constant dense<0.000000e+00> : vector<8x32xf32>
    %22 = tpu.matmul %13, %7, %cst_13 {dimension_numbers = #tpu.dot_dimension_numbers<[1], [0], [0], [1], [0, 0, 1, 1], [], []>} : vector<8x32xf32>, vector<32x32xf32>, vector<8x32xf32> -> vector<8x32xf32>
    %23 = arith.addf %21, %22 : vector<8x32xf32>
    %24 = math.tanh %23 : vector<8x32xf32>
    %c1_i32 = arith.constant 1 : i32
    %25 = vector.broadcast %c1_i32 : i32 to vector<8x1xi32>
    %26 = arith.cmpi sgt, %6, %25 : vector<8x1xi32>
    %cst_14 = arith.constant 0.000000e+00 : f32
    %27 = vector.shape_cast %26 : vector<8x1xi1> to vector<8x1xi1>
    %28 = vector.broadcast %27 : vector<8x1xi1> to vector<8x32xi1>
    %29 = vector.broadcast %cst_14 : f32 to vector<8x32xf32>
    %30 = arith.select %28, %24, %29 : vector<8x32xi1>, vector<8x32xf32>
    %31 = arith.maximumf %20, %30 : vector<8x32xf32>
    %32 = vector.extract_strided_slice %5 {offsets = [16, 0], sizes = [8, 32], strides = [1, 1]} : vector<64x32xf32> to vector<8x32xf32>
    %cst_15 = arith.constant dense<0.000000e+00> : vector<8x32xf32>
    %33 = tpu.matmul %24, %7, %cst_15 {dimension_numbers = #tpu.dot_dimension_numbers<[1], [0], [0], [1], [0, 0, 1, 1], [], []>} : vector<8x32xf32>, vector<32x32xf32>, vector<8x32xf32> -> vector<8x32xf32>
    %34 = arith.addf %32, %33 : vector<8x32xf32>
    %35 = math.tanh %34 : vector<8x32xf32>
    %c2_i32 = arith.constant 2 : i32
    %36 = vector.broadcast %c2_i32 : i32 to vector<8x1xi32>
    %37 = arith.cmpi sgt, %6, %36 : vector<8x1xi32>
    %cst_16 = arith.constant 0.000000e+00 : f32
    %38 = vector.shape_cast %37 : vector<8x1xi1> to vector<8x1xi1>
    %39 = vector.broadcast %38 : vector<8x1xi1> to vector<8x32xi1>
    %40 = vector.broadcast %cst_16 : f32 to vector<8x32xf32>
    %41 = arith.select %39, %35, %40 : vector<8x32xi1>, vector<8x32xf32>
    %42 = arith.maximumf %31, %41 : vector<8x32xf32>
    %43 = vector.extract_strided_slice %5 {offsets = [24, 0], sizes = [8, 32], strides = [1, 1]} : vector<64x32xf32> to vector<8x32xf32>
    %cst_17 = arith.constant dense<0.000000e+00> : vector<8x32xf32>
    %44 = tpu.matmul %35, %7, %cst_17 {dimension_numbers = #tpu.dot_dimension_numbers<[1], [0], [0], [1], [0, 0, 1, 1], [], []>} : vector<8x32xf32>, vector<32x32xf32>, vector<8x32xf32> -> vector<8x32xf32>
    %45 = arith.addf %43, %44 : vector<8x32xf32>
    %46 = math.tanh %45 : vector<8x32xf32>
    %c3_i32 = arith.constant 3 : i32
    %47 = vector.broadcast %c3_i32 : i32 to vector<8x1xi32>
    %48 = arith.cmpi sgt, %6, %47 : vector<8x1xi32>
    %cst_18 = arith.constant 0.000000e+00 : f32
    %49 = vector.shape_cast %48 : vector<8x1xi1> to vector<8x1xi1>
    %50 = vector.broadcast %49 : vector<8x1xi1> to vector<8x32xi1>
    %51 = vector.broadcast %cst_18 : f32 to vector<8x32xf32>
    %52 = arith.select %50, %46, %51 : vector<8x32xi1>, vector<8x32xf32>
    %53 = arith.maximumf %42, %52 : vector<8x32xf32>
    %54 = vector.extract_strided_slice %5 {offsets = [32, 0], sizes = [8, 32], strides = [1, 1]} : vector<64x32xf32> to vector<8x32xf32>
    %cst_19 = arith.constant dense<0.000000e+00> : vector<8x32xf32>
    %55 = tpu.matmul %46, %7, %cst_19 {dimension_numbers = #tpu.dot_dimension_numbers<[1], [0], [0], [1], [0, 0, 1, 1], [], []>} : vector<8x32xf32>, vector<32x32xf32>, vector<8x32xf32> -> vector<8x32xf32>
    %56 = arith.addf %54, %55 : vector<8x32xf32>
    %57 = math.tanh %56 : vector<8x32xf32>
    %c4_i32 = arith.constant 4 : i32
    %58 = vector.broadcast %c4_i32 : i32 to vector<8x1xi32>
    %59 = arith.cmpi sgt, %6, %58 : vector<8x1xi32>
    %cst_20 = arith.constant 0.000000e+00 : f32
    %60 = vector.shape_cast %59 : vector<8x1xi1> to vector<8x1xi1>
    %61 = vector.broadcast %60 : vector<8x1xi1> to vector<8x32xi1>
    %62 = vector.broadcast %cst_20 : f32 to vector<8x32xf32>
    %63 = arith.select %61, %57, %62 : vector<8x32xi1>, vector<8x32xf32>
    %64 = arith.maximumf %53, %63 : vector<8x32xf32>
    %65 = vector.extract_strided_slice %5 {offsets = [40, 0], sizes = [8, 32], strides = [1, 1]} : vector<64x32xf32> to vector<8x32xf32>
    %cst_21 = arith.constant dense<0.000000e+00> : vector<8x32xf32>
    %66 = tpu.matmul %57, %7, %cst_21 {dimension_numbers = #tpu.dot_dimension_numbers<[1], [0], [0], [1], [0, 0, 1, 1], [], []>} : vector<8x32xf32>, vector<32x32xf32>, vector<8x32xf32> -> vector<8x32xf32>
    %67 = arith.addf %65, %66 : vector<8x32xf32>
    %68 = math.tanh %67 : vector<8x32xf32>
    %c5_i32 = arith.constant 5 : i32
    %69 = vector.broadcast %c5_i32 : i32 to vector<8x1xi32>
    %70 = arith.cmpi sgt, %6, %69 : vector<8x1xi32>
    %cst_22 = arith.constant 0.000000e+00 : f32
    %71 = vector.shape_cast %70 : vector<8x1xi1> to vector<8x1xi1>
    %72 = vector.broadcast %71 : vector<8x1xi1> to vector<8x32xi1>
    %73 = vector.broadcast %cst_22 : f32 to vector<8x32xf32>
    %74 = arith.select %72, %68, %73 : vector<8x32xi1>, vector<8x32xf32>
    %75 = arith.maximumf %64, %74 : vector<8x32xf32>
    %76 = vector.extract_strided_slice %5 {offsets = [48, 0], sizes = [8, 32], strides = [1, 1]} : vector<64x32xf32> to vector<8x32xf32>
    %cst_23 = arith.constant dense<0.000000e+00> : vector<8x32xf32>
    %77 = tpu.matmul %68, %7, %cst_23 {dimension_numbers = #tpu.dot_dimension_numbers<[1], [0], [0], [1], [0, 0, 1, 1], [], []>} : vector<8x32xf32>, vector<32x32xf32>, vector<8x32xf32> -> vector<8x32xf32>
    %78 = arith.addf %76, %77 : vector<8x32xf32>
    %79 = math.tanh %78 : vector<8x32xf32>
    %c6_i32 = arith.constant 6 : i32
    %80 = vector.broadcast %c6_i32 : i32 to vector<8x1xi32>
    %81 = arith.cmpi sgt, %6, %80 : vector<8x1xi32>
    %cst_24 = arith.constant 0.000000e+00 : f32
    %82 = vector.shape_cast %81 : vector<8x1xi1> to vector<8x1xi1>
    %83 = vector.broadcast %82 : vector<8x1xi1> to vector<8x32xi1>
    %84 = vector.broadcast %cst_24 : f32 to vector<8x32xf32>
    %85 = arith.select %83, %79, %84 : vector<8x32xi1>, vector<8x32xf32>
    %86 = arith.maximumf %75, %85 : vector<8x32xf32>
    %87 = vector.extract_strided_slice %5 {offsets = [56, 0], sizes = [8, 32], strides = [1, 1]} : vector<64x32xf32> to vector<8x32xf32>
    %cst_25 = arith.constant dense<0.000000e+00> : vector<8x32xf32>
    %88 = tpu.matmul %79, %7, %cst_25 {dimension_numbers = #tpu.dot_dimension_numbers<[1], [0], [0], [1], [0, 0, 1, 1], [], []>} : vector<8x32xf32>, vector<32x32xf32>, vector<8x32xf32> -> vector<8x32xf32>
    %89 = arith.addf %87, %88 : vector<8x32xf32>
    %90 = math.tanh %89 : vector<8x32xf32>
    %c7_i32 = arith.constant 7 : i32
    %91 = vector.broadcast %c7_i32 : i32 to vector<8x1xi32>
    %92 = arith.cmpi sgt, %6, %91 : vector<8x1xi32>
    %cst_26 = arith.constant 0.000000e+00 : f32
    %93 = vector.shape_cast %92 : vector<8x1xi1> to vector<8x1xi1>
    %94 = vector.broadcast %93 : vector<8x1xi1> to vector<8x32xi1>
    %95 = vector.broadcast %cst_26 : f32 to vector<8x32xf32>
    %96 = arith.select %94, %90, %95 : vector<8x32xi1>, vector<8x32xf32>
    %97 = arith.maximumf %86, %96 : vector<8x32xf32>
    %c0_27 = arith.constant 0 : index
    %c0_28 = arith.constant 0 : index
    %98 = vector.load %arg5[%c0_27, %c0_28] : memref<32x64xf32, #tpu.memory_space<vmem>>, vector<32x64xf32>
    %cst_29 = arith.constant dense<0.000000e+00> : vector<8x64xf32>
    %99 = tpu.matmul %97, %98, %cst_29 {dimension_numbers = #tpu.dot_dimension_numbers<[1], [0], [0], [1], [0, 0, 1, 1], [], []>} : vector<8x32xf32>, vector<32x64xf32>, vector<8x64xf32> -> vector<8x64xf32>
    %c0_30 = arith.constant 0 : index
    %c0_31 = arith.constant 0 : index
    %100 = vector.load %arg6[%c0_30, %c0_31] : memref<1x64xf32, #tpu.memory_space<vmem>>, vector<1x64xf32>
    %101 = vector.broadcast %100 : vector<1x64xf32> to vector<8x64xf32>
    %102 = arith.addf %99, %101 : vector<8x64xf32>
    %103 = math.tanh %102 : vector<8x64xf32>
    %c0_32 = arith.constant 0 : index
    %c0_33 = arith.constant 0 : index
    %104 = vector.load %arg7[%c0_32, %c0_33] : memref<64x64xf32, #tpu.memory_space<vmem>>, vector<64x64xf32>
    %cst_34 = arith.constant dense<0.000000e+00> : vector<8x64xf32>
    %105 = tpu.matmul %103, %104, %cst_34 {dimension_numbers = #tpu.dot_dimension_numbers<[1], [0], [0], [1], [0, 0, 1, 1], [], []>} : vector<8x64xf32>, vector<64x64xf32>, vector<8x64xf32> -> vector<8x64xf32>
    %c0_35 = arith.constant 0 : index
    %c0_36 = arith.constant 0 : index
    %106 = vector.load %arg8[%c0_35, %c0_36] : memref<1x64xf32, #tpu.memory_space<vmem>>, vector<1x64xf32>
    %107 = vector.broadcast %106 : vector<1x64xf32> to vector<8x64xf32>
    %108 = arith.addf %105, %107 : vector<8x64xf32>
    %109 = math.tanh %108 : vector<8x64xf32>
    %c0_37 = arith.constant 0 : index
    %c0_38 = arith.constant 0 : index
    %110 = vector.load %arg9[%c0_37, %c0_38] : memref<64x128xf32, #tpu.memory_space<vmem>>, vector<64x128xf32>
    %cst_39 = arith.constant dense<0.000000e+00> : vector<8x128xf32>
    %111 = tpu.matmul %109, %110, %cst_39 {dimension_numbers = #tpu.dot_dimension_numbers<[1], [0], [0], [1], [0, 0, 1, 1], [], []>} : vector<8x64xf32>, vector<64x128xf32>, vector<8x128xf32> -> vector<8x128xf32>
    %c0_40 = arith.constant 0 : index
    %c0_41 = arith.constant 0 : index
    %112 = vector.load %arg10[%c0_40, %c0_41] : memref<1x128xf32, #tpu.memory_space<vmem>>, vector<1x128xf32>
    %113 = vector.broadcast %112 : vector<1x128xf32> to vector<8x128xf32>
    %114 = arith.addf %111, %113 : vector<8x128xf32>
    %c0_42 = arith.constant 0 : index
    %c0_43 = arith.constant 0 : index
    %115 = vector.load %arg11[%c0_42, %c0_43] : memref<8x128xf32, #tpu.memory_space<vmem>>, vector<8x128xf32>
    tpu.vector_store %arg11[%c0_42, %c0_43], %114 {strides = array<i32>} : memref<8x128xf32, #tpu.memory_space<vmem>>, vector<8x128xf32>,
    return
  }
}

</mosaic_0001>

<llo_original>
// kernel: rnn_module_forward.1
$region0: #{rnn_module_forward.1}
  #allocation0 [shape = 'u32[]', space=smem, size = 0x4, offset = 0x4, fixed_abs, tag = 'smem constant byte address 0x4 - core index']
  #allocation1 [shape = 'u32[72,128]{1,0:T(1,128)}', space=vmem, size = 0x9000, scoped, tag = 'internal scratch']
  %s0 = inlined_call_operand.vmem [shape: s32[8,1], index: 0, kind: input, shape index: {}]
  %s1 = inlined_call_operand.hbm [shape: f32[64,32], index: 1, kind: input, shape index: {}]
  %s2 = inlined_call_operand.hbm [shape: f32[32,32], index: 2, kind: input, shape index: {}]
  %s3 = inlined_call_operand.hbm [shape: f32[32,32], index: 3, kind: input, shape index: {}]
  %s4 = inlined_call_operand.vmem [shape: f32[1,32], index: 4, kind: input, shape index: {}]
  %s5 = inlined_call_operand.hbm [shape: f32[32,64], index: 5, kind: input, shape index: {}]
  %s6 = inlined_call_operand.vmem [shape: f32[1,64], index: 6, kind: input, shape index: {}]
  %s7 = inlined_call_operand.hbm [shape: f32[64,64], index: 7, kind: input, shape index: {}]
  %s8 = inlined_call_operand.vmem [shape: f32[1,64], index: 8, kind: input, shape index: {}]
  %s9 = inlined_call_operand.hbm [shape: f32[64,128], index: 9, kind: input, shape index: {}]
  %s10 = inlined_call_operand.vmem [shape: f32[1,128], index: 10, kind: input, shape index: {}]
  %s11 = inlined_call_operand.vmem [shape: f32[8,128], index: 11, kind: output, shape index: {}]
  %s12 = sld [smem:[#allocation0]]
  $region78: #{rnn_module_forward.1} parent=0
    _
  %s14 = ssub.s32 1, %s12
  %s15 = scalar_select 0, %s14, %s12
  $region1: #{rnn_module_forward.1} parent=0
    #allocation2 [shape = 'u8[32768]{0}', space=vmem, size = 0x8000, scoped, tag = 'input window, operand 1, single buffered']
    #allocation3 [shape = 's32[1]{0}', space=sflag, size = 0x4, scoped, tag = 'scoped memory for rnn_module_forward.1']
    #allocation4 [shape = 'u8[16384]{0}', space=vmem, size = 0x4000, scoped, tag = 'input window, operand 2, single buffered']
    #allocation5 [shape = 's32[1]{0}', space=sflag, size = 0x4, scoped, tag = 'scoped memory for rnn_module_forward.1']
    #allocation6 [shape = 'u8[16384]{0}', space=vmem, size = 0x4000, scoped, tag = 'input window, operand 3, single buffered']
    #allocation7 [shape = 'u8[16384]{0}', space=vmem, size = 0x4000, scoped, tag = 'input window, operand 5, single buffered']
    #allocation8 [shape = 's32[1]{0}', space=sflag, size = 0x4, scoped, tag = 'scoped memory for rnn_module_forward.1']
    #allocation9 [shape = 'u8[32768]{0}', space=vmem, size = 0x8000, scoped, tag = 'input window, operand 7, single buffered']
    #allocation10 [shape = 'u8[32768]{0}', space=vmem, size = 0x8000, scoped, tag = 'input window, operand 9, single buffered']
    #allocation11 [shape = 's32[1]{0}', space=sflag, size = 0x4, scoped, tag = 'scoped memory for rnn_module_forward.1']
    %16 = vsyncpa [#allocation3], 0
    %17 = vsyncpa [#allocation5], 0
    %18 = vsyncpa [#allocation8], 0
    %19 = vsyncpa [#allocation11], 0
    // Predicated region
    $region2: #{rnn_module_forward.1} parent=1 // pred_check
      _
    $region3: #{rnn_module_forward.1} parent=1 // pred_check_branch
      %21 = sbr.rel (0) target = $region5
    $region4: #{rnn_module_forward.1} parent=1 // pred_region
      _
    $region5: #{rnn_module_forward.1} parent=1 // pred_fallthru
      _
    // Predicated region
    $region6: #{rnn_module_forward.1} parent=1 // pred_check
      _
    $region7: #{rnn_module_forward.1} parent=1 // pred_check_branch
      %23 = sbr.rel (0) target = $region9
    $region8: #{rnn_module_forward.1} parent=1 // pred_region
      %25 = vsyncadd [#allocation3], 0
      %s26 = sshll.u32 %s1, 4
      %s27 = int_to_ptr.hbm [resolvable:$true] %s26
      %s28 = sshll.u32 [#allocation2], 4
      %s29 = int_to_ptr.vmem [resolvable:$true] %s28
      %34 = dma.hbm_to_vmem [thread:$0]  %s27, 1024, %s29, [#allocation3], 128, 128, 8
    $region9: #{rnn_module_forward.1} parent=1 // pred_fallthru
      _
    // Predicated region
    $region10: #{rnn_module_forward.1} parent=1 // pred_check
      _
    $region11: #{rnn_module_forward.1} parent=1 // pred_check_branch
      %36 = sbr.rel (0) target = $region13
    $region12: #{rnn_module_forward.1} parent=1 // pred_region
      %38 = vsyncadd [#allocation5], 0
      %s39 = sshll.u32 %s2, 4
      %s40 = int_to_ptr.hbm [resolvable:$true] %s39
      %s41 = sshll.u32 [#allocation4], 4
      %s42 = int_to_ptr.vmem [resolvable:$true] %s41
      %47 = dma.hbm_to_vmem [thread:$0]  %s40, 512, %s42, [#allocation5], 128, 128, 8
    $region13: #{rnn_module_forward.1} parent=1 // pred_fallthru
      _
    // Predicated region
    $region14: #{rnn_module_forward.1} parent=1 // pred_check
      _
    $region15: #{rnn_module_forward.1} parent=1 // pred_check_branch
      %49 = sbr.rel (0) target = $region17
    $region16: #{rnn_module_forward.1} parent=1 // pred_region
      %51 = vsyncadd [#allocation5], 0
      %s52 = sshll.u32 %s3, 4
      %s53 = int_to_ptr.hbm [resolvable:$true] %s52
      %s54 = sshll.u32 [#allocation6], 4
      %s55 = int_to_ptr.vmem [resolvable:$true] %s54
      %60 = dma.hbm_to_vmem [thread:$0]  %s53, 512, %s55, [#allocation5], 128, 128, 8
    $region17: #{rnn_module_forward.1} parent=1 // pred_fallthru
      _
    // Predicated region
    $region18: #{rnn_module_forward.1} parent=1 // pred_check
      _
    $region19: #{rnn_module_forward.1} parent=1 // pred_check_branch
      %62 = sbr.rel (0) target = $region21
    $region20: #{rnn_module_forward.1} parent=1 // pred_region
      _
    $region21: #{rnn_module_forward.1} parent=1 // pred_fallthru
      _
    // Predicated region
    $region22: #{rnn_module_forward.1} parent=1 // pred_check
      _
    $region23: #{rnn_module_forward.1} parent=1 // pred_check_branch
      %64 = sbr.rel (0) target = $region25
    $region24: #{rnn_module_forward.1} parent=1 // pred_region
      %66 = vsyncadd [#allocation8], 0
      %s67 = sshll.u32 %s5, 4
      %s68 = int_to_ptr.hbm [resolvable:$true] %s67
      %s69 = sshll.u32 [#allocation7], 4
      %s70 = int_to_ptr.vmem [resolvable:$true] %s69
      %75 = dma.hbm_to_vmem [thread:$0]  %s68, 512, %s70, [#allocation8], 128, 128, 8
    $region25: #{rnn_module_forward.1} parent=1 // pred_fallthru
      _
    // Predicated region
    $region26: #{rnn_module_forward.1} parent=1 // pred_check
      _
    $region27: #{rnn_module_forward.1} parent=1 // pred_check_branch
      %77 = sbr.rel (0) target = $region29
    $region28: #{rnn_module_forward.1} parent=1 // pred_region
      _
    $region29: #{rnn_module_forward.1} parent=1 // pred_fallthru
      _
    // Predicated region
    $region30: #{rnn_module_forward.1} parent=1 // pred_check
      _
    $region31: #{rnn_module_forward.1} parent=1 // pred_check_branch
      %79 = sbr.rel (0) target = $region33
    $region32: #{rnn_module_forward.1} parent=1 // pred_region
      %81 = vsyncadd [#allocation8], 0
      %s82 = sshll.u32 %s7, 4
      %s83 = int_to_ptr.hbm [resolvable:$true] %s82
      %s84 = sshll.u32 [#allocation9], 4
      %s85 = int_to_ptr.vmem [resolvable:$true] %s84
      %90 = dma.hbm_to_vmem [thread:$0]  %s83, 1024, %s85, [#allocation8], 128, 128, 8
    $region33: #{rnn_module_forward.1} parent=1 // pred_fallthru
      _
    // Predicated region
    $region34: #{rnn_module_forward.1} parent=1 // pred_check
      _
    $region35: #{rnn_module_forward.1} parent=1 // pred_check_branch
      %92 = sbr.rel (0) target = $region37
    $region36: #{rnn_module_forward.1} parent=1 // pred_region
      _
    $region37: #{rnn_module_forward.1} parent=1 // pred_fallthru
      _
    // Predicated region
    $region38: #{rnn_module_forward.1} parent=1 // pred_check
      _
    $region39: #{rnn_module_forward.1} parent=1 // pred_check_branch
      %94 = sbr.rel (0) target = $region41
    $region40: #{rnn_module_forward.1} parent=1 // pred_region
      %96 = vsyncadd [#allocation11], 0
      %s97 = sshll.u32 %s9, 4
      %s98 = int_to_ptr.hbm [resolvable:$true] %s97
      %s99 = sshll.u32 [#allocation10], 4
      %s100 = int_to_ptr.vmem [resolvable:$true] %s99
      %105 = dma.hbm_to_vmem [thread:$0]  %s98, 1024, %s100, [#allocation11], 128, 128, 8
    $region41: #{rnn_module_forward.1} parent=1 // pred_fallthru
      _
    // Predicated region
    $region42: #{rnn_module_forward.1} parent=1 // pred_check
      _
    $region43: #{rnn_module_forward.1} parent=1 // pred_check_branch
      %107 = sbr.rel (0) target = $region45
    $region44: #{rnn_module_forward.1} parent=1 // pred_region
      _
    $region45: #{rnn_module_forward.1} parent=1 // pred_fallthru
      _
    // Predicated region
    $region46: #{rnn_module_forward.1} parent=1 // pred_check
      _
    $region47: #{rnn_module_forward.1} parent=1 // pred_check_branch
      %109 = sbr.rel (0) target = $region49
    $region48: #{rnn_module_forward.1} parent=1 // pred_region
      %111 = dma.done [#allocation3], 1024
    $region49: #{rnn_module_forward.1} parent=1 // pred_fallthru
      _
    // Predicated region
    $region50: #{rnn_module_forward.1} parent=1 // pred_check
      _
    $region51: #{rnn_module_forward.1} parent=1 // pred_check_branch
      %113 = sbr.rel (0) target = $region53
    $region52: #{rnn_module_forward.1} parent=1 // pred_region
      %115 = dma.done [#allocation5], 512
    $region53: #{rnn_module_forward.1} parent=1 // pred_fallthru
      _
    // Predicated region
    $region54: #{rnn_module_forward.1} parent=1 // pred_check
      _
    $region55: #{rnn_module_forward.1} parent=1 // pred_check_branch
      %117 = sbr.rel (0) target = $region57
    $region56: #{rnn_module_forward.1} parent=1 // pred_region
      %119 = dma.done [#allocation5], 512
    $region57: #{rnn_module_forward.1} parent=1 // pred_fallthru
      _
    // Predicated region
    $region58: #{rnn_module_forward.1} parent=1 // pred_check
      _
    $region59: #{rnn_module_forward.1} parent=1 // pred_check_branch
      %121 = sbr.rel (0) target = $region61
    $region60: #{rnn_module_forward.1} parent=1 // pred_region
      %123 = dma.done [#allocation8], 512
    $region61: #{rnn_module_forward.1} parent=1 // pred_fallthru
      _
    // Predicated region
    $region62: #{rnn_module_forward.1} parent=1 // pred_check
      _
    $region63: #{rnn_module_forward.1} parent=1 // pred_check_branch
      %125 = sbr.rel (0) target = $region65
    $region64: #{rnn_module_forward.1} parent=1 // pred_region
      %127 = dma.done [#allocation8], 1024
    $region65: #{rnn_module_forward.1} parent=1 // pred_fallthru
      _
    // Predicated region
    $region66: #{rnn_module_forward.1} parent=1 // pred_check
      _
    $region67: #{rnn_module_forward.1} parent=1 // pred_check_branch
      %129 = sbr.rel (0) target = $region69
    $region68: #{rnn_module_forward.1} parent=1 // pred_region
      %131 = dma.done [#allocation11], 1024
    $region69: #{rnn_module_forward.1} parent=1 // pred_fallthru
      _
    %v132 = vld [vmem:[#allocation2] sm:$0xff]
    %v133 = vld [vmem:[#allocation2 + $0x8] sm:$0xff]
    %v134 = vld [vmem:[#allocation2 + $0x10] sm:$0xff]
    %v135 = vld [vmem:[#allocation2 + $0x18] sm:$0xff]
    %v136 = vld [vmem:[#allocation2 + $0x20] sm:$0xff]
    %v137 = vld [vmem:[#allocation2 + $0x28] sm:$0xff]
    %v138 = vld [vmem:[#allocation2 + $0x30] sm:$0xff]
    %v139 = vld [vmem:[#allocation2 + $0x38] sm:$0xff]
    %v140 = vld [vmem:[#allocation4] sm:$0xff]
    %v141 = vld [vmem:[#allocation4 + $0x8] sm:$0xff]
    %v142 = vld [vmem:[#allocation4 + $0x10] sm:$0xff]
    %v143 = vld [vmem:[#allocation4 + $0x18] sm:$0xff]
    %v144 = vld [vmem:[%s4] sm:$0x1]
    %v146 = vperm.slane %v144, 0
    %vm148 = vcmask 261120
    %v150 = vsel %vm148, %v132, 0
    %v153 = vsel %vm148, %v133, 0
    %v156 = vsel %vm148, %v134, 0
    %v159 = vsel %vm148, %v135, 0
    %v162 = vsel %vm148, %v136, 0
    %v165 = vsel %vm148, %v137, 0
    %v168 = vsel %vm148, %v138, 0
    %v171 = vsel %vm148, %v139, 0
    %173 = vmatpush.msra.mxu0 0.0
    %174 = vmatpush.msra.mxu0 0.0
    %175 = vmatpush.msra.mxu0 0.0
    %176 = vmatpush.msra.mxu0 0.0
    %177 = vmatpush.msra.mxu0 0.0
    %178 = vmatpush.msra.mxu0 0.0
    %179 = vmatpush.msra.mxu0 0.0
    %180 = vmatpush.msra.mxu0 0.0
    %181 = vmatpush.msra.mxu0 0.0
    %182 = vmatpush.msra.mxu0 0.0
    %183 = vmatpush.msra.mxu0 0.0
    %184 = vmatpush.msra.mxu0 0.0
    %185 = vmatpush.msra.mxu0 %v143
    %186 = vmatpush.msra.mxu0 %v142
    %187 = vmatpush.msra.mxu0 %v141
    %188 = vmatpush.msra.mxu0 %v140
    %189 = vmatmul.f32.gmra.mxu0 %v150
    %v190 = vpop.f32.mrf.mxu0
    %v191 = vadd.f32 %v146, %v190
    %192 = vmatmul.f32.gmra.mxu0 %v153
    %v193 = vpop.f32.mrf.mxu0
    %v194 = vadd.f32 %v146, %v193
    %195 = vmatmul.f32.gmra.mxu0 %v156
    %v196 = vpop.f32.mrf.mxu0
    %v197 = vadd.f32 %v146, %v196
    %198 = vmatmul.f32.gmra.mxu0 %v159
    %v199 = vpop.f32.mrf.mxu0
    %v200 = vadd.f32 %v146, %v199
    %201 = vmatmul.f32.gmra.mxu0 %v162
    %v202 = vpop.f32.mrf.mxu0
    %v203 = vadd.f32 %v146, %v202
    %204 = vmatmul.f32.gmra.mxu0 %v165
    %v205 = vpop.f32.mrf.mxu0
    %v206 = vadd.f32 %v146, %v205
    %207 = vmatmul.f32.gmra.mxu0 %v168
    %v208 = vpop.f32.mrf.mxu0
    %v209 = vadd.f32 %v146, %v208
    %210 = vmatmul.f32.gmra.mxu0 %v171
    %v211 = vpop.f32.mrf.mxu0
    %v212 = vadd.f32 %v146, %v211
    %213 = vdwg.mxu0
    %v214 = vld [vmem:[%s0] sm:$0xff]
    %v215 = vld [vmem:[#allocation6] sm:$0xff]
    %v216 = vld [vmem:[#allocation6 + $0x8] sm:$0xff]
    %v217 = vld [vmem:[#allocation6 + $0x10] sm:$0xff]
    %v218 = vld [vmem:[#allocation6 + $0x18] sm:$0xff]
    %v220 = vsel %vm148, 0.0, 0
    %222 = vmatpush.msra.mxu0 0.0
    %223 = vmatpush.msra.mxu0 0.0
    %224 = vmatpush.msra.mxu0 0.0
    %225 = vmatpush.msra.mxu0 0.0
    %226 = vmatpush.msra.mxu0 0.0
    %227 = vmatpush.msra.mxu0 0.0
    %228 = vmatpush.msra.mxu0 0.0
    %229 = vmatpush.msra.mxu0 0.0
    %230 = vmatpush.msra.mxu0 0.0
    %231 = vmatpush.msra.mxu0 0.0
    %232 = vmatpush.msra.mxu0 0.0
    %233 = vmatpush.msra.mxu0 0.0
    %234 = vmatpush.msra.mxu0 %v218
    %235 = vmatpush.msra.mxu0 %v217
    %236 = vmatpush.msra.mxu0 %v216
    %237 = vmatpush.msra.mxu0 %v215
    %238 = vmatmul.f32.gmra.mxu0 %v220
    %v239 = vpop.f32.mrf.mxu0
    %v240 = vadd.f32 0.0, %v239
    %241 = vdwg.mxu0
    %v242 = vadd.f32 %v191, %v240
    %v243 = vtanh.pop %v242
    %vm244 = vcmp.gt.s32.totalorder %v214, 0
    %v245 = vsel %vm244, 1, 0
    %246 = vset.pattern.permute.xlu0 0
    %247 = vperm.xlu0 %246, %v245
    %v248 = vpop.permute.xlu0 %247
    %vm249 = vcmp.eq.s32.totalorder %v248, 1
    %v250 = vsel %vm249, %v243, 0.0
    %v252 = vsel %vm148, %v243, 0
    %254 = vmatpush.msra.mxu0 0.0
    %255 = vmatpush.msra.mxu0 0.0
    %256 = vmatpush.msra.mxu0 0.0
    %257 = vmatpush.msra.mxu0 0.0
    %258 = vmatpush.msra.mxu0 0.0
    %259 = vmatpush.msra.mxu0 0.0
    %260 = vmatpush.msra.mxu0 0.0
    %261 = vmatpush.msra.mxu0 0.0
    %262 = vmatpush.msra.mxu0 0.0
    %263 = vmatpush.msra.mxu0 0.0
    %264 = vmatpush.msra.mxu0 0.0
    %265 = vmatpush.msra.mxu0 0.0
    %266 = vmatpush.msra.mxu0 %v218
    %267 = vmatpush.msra.mxu0 %v217
    %268 = vmatpush.msra.mxu0 %v216
    %269 = vmatpush.msra.mxu0 %v215
    %270 = vmatmul.f32.gmra.mxu0 %v252
    %v271 = vpop.f32.mrf.mxu0
    %v272 = vadd.f32 0.0, %v271
    %273 = vdwg.mxu0
    %v274 = vadd.f32 %v194, %v272
    %v275 = vtanh.pop %v274
    %vm276 = vcmp.gt.s32.totalorder %v214, 1
    %v277 = vsel %vm276, 1, 0
    %278 = vset.pattern.permute.xlu0 0
    %279 = vperm.xlu0 %278, %v277
    %v280 = vpop.permute.xlu0 %279
    %vm281 = vcmp.eq.s32.totalorder %v280, 1
    %v282 = vsel %vm281, %v275, 0.0
    %v283 = vmax.f32 %v250, %v282
    %v285 = vsel %vm148, %v275, 0
    %287 = vmatpush.msra.mxu0 0.0
    %288 = vmatpush.msra.mxu0 0.0
    %289 = vmatpush.msra.mxu0 0.0
    %290 = vmatpush.msra.mxu0 0.0
    %291 = vmatpush.msra.mxu0 0.0
    %292 = vmatpush.msra.mxu0 0.0
    %293 = vmatpush.msra.mxu0 0.0
    %294 = vmatpush.msra.mxu0 0.0
    %295 = vmatpush.msra.mxu0 0.0
    %296 = vmatpush.msra.mxu0 0.0
    %297 = vmatpush.msra.mxu0 0.0
    %298 = vmatpush.msra.mxu0 0.0
    %299 = vmatpush.msra.mxu0 %v218
    %300 = vmatpush.msra.mxu0 %v217
    %301 = vmatpush.msra.mxu0 %v216
    %302 = vmatpush.msra.mxu0 %v215
    %303 = vmatmul.f32.gmra.mxu0 %v285
    %v304 = vpop.f32.mrf.mxu0
    %v305 = vadd.f32 0.0, %v304
    %306 = vdwg.mxu0
    %v307 = vadd.f32 %v197, %v305
    %v308 = vtanh.pop %v307
    %vm309 = vcmp.gt.s32.totalorder %v214, 2
    %v310 = vsel %vm309, 1, 0
    %311 = vset.pattern.permute.xlu0 0
    %312 = vperm.xlu0 %311, %v310
    %v313 = vpop.permute.xlu0 %312
    %vm314 = vcmp.eq.s32.totalorder %v313, 1
    %v315 = vsel %vm314, %v308, 0.0
    %v316 = vmax.f32 %v283, %v315
    %v318 = vsel %vm148, %v308, 0
    %320 = vmatpush.msra.mxu0 0.0
    %321 = vmatpush.msra.mxu0 0.0
    %322 = vmatpush.msra.mxu0 0.0
    %323 = vmatpush.msra.mxu0 0.0
    %324 = vmatpush.msra.mxu0 0.0
    %325 = vmatpush.msra.mxu0 0.0
    %326 = vmatpush.msra.mxu0 0.0
    %327 = vmatpush.msra.mxu0 0.0
    %328 = vmatpush.msra.mxu0 0.0
    %329 = vmatpush.msra.mxu0 0.0
    %330 = vmatpush.msra.mxu0 0.0
    %331 = vmatpush.msra.mxu0 0.0
    %332 = vmatpush.msra.mxu0 %v218
    %333 = vmatpush.msra.mxu0 %v217
    %334 = vmatpush.msra.mxu0 %v216
    %335 = vmatpush.msra.mxu0 %v215
    %336 = vmatmul.f32.gmra.mxu0 %v318
    %v337 = vpop.f32.mrf.mxu0
    %v338 = vadd.f32 0.0, %v337
    %339 = vdwg.mxu0
    %v340 = vadd.f32 %v200, %v338
    %v341 = vtanh.pop %v340
    %vm342 = vcmp.gt.s32.totalorder %v214, 3
    %v343 = vsel %vm342, 1, 0
    %344 = vset.pattern.permute.xlu0 0
    %345 = vperm.xlu0 %344, %v343
    %v346 = vpop.permute.xlu0 %345
    %vm347 = vcmp.eq.s32.totalorder %v346, 1
    %v348 = vsel %vm347, %v341, 0.0
    %v349 = vmax.f32 %v316, %v348
    %v351 = vsel %vm148, %v341, 0
    %353 = vmatpush.msra.mxu0 0.0
    %354 = vmatpush.msra.mxu0 0.0
    %355 = vmatpush.msra.mxu0 0.0
    %356 = vmatpush.msra.mxu0 0.0
    %357 = vmatpush.msra.mxu0 0.0
    %358 = vmatpush.msra.mxu0 0.0
    %359 = vmatpush.msra.mxu0 0.0
    %360 = vmatpush.msra.mxu0 0.0
    %361 = vmatpush.msra.mxu0 0.0
    %362 = vmatpush.msra.mxu0 0.0
    %363 = vmatpush.msra.mxu0 0.0
    %364 = vmatpush.msra.mxu0 0.0
    %365 = vmatpush.msra.mxu0 %v218
    %366 = vmatpush.msra.mxu0 %v217
    %367 = vmatpush.msra.mxu0 %v216
    %368 = vmatpush.msra.mxu0 %v215
    %369 = vmatmul.f32.gmra.mxu0 %v351
    %v370 = vpop.f32.mrf.mxu0
    %v371 = vadd.f32 0.0, %v370
    %372 = vdwg.mxu0
    %v373 = vadd.f32 %v203, %v371
    %v374 = vtanh.pop %v373
    %vm375 = vcmp.gt.s32.totalorder %v214, 4
    %v376 = vsel %vm375, 1, 0
    %377 = vset.pattern.permute.xlu0 0
    %378 = vperm.xlu0 %377, %v376
    %v379 = vpop.permute.xlu0 %378
    %vm380 = vcmp.eq.s32.totalorder %v379, 1
    %v381 = vsel %vm380, %v374, 0.0
    %v382 = vmax.f32 %v349, %v381
    %v384 = vsel %vm148, %v374, 0
    %386 = vmatpush.msra.mxu0 0.0
    %387 = vmatpush.msra.mxu0 0.0
    %388 = vmatpush.msra.mxu0 0.0
    %389 = vmatpush.msra.mxu0 0.0
    %390 = vmatpush.msra.mxu0 0.0
    %391 = vmatpush.msra.mxu0 0.0
    %392 = vmatpush.msra.mxu0 0.0
    %393 = vmatpush.msra.mxu0 0.0
    %394 = vmatpush.msra.mxu0 0.0
    %395 = vmatpush.msra.mxu0 0.0
    %396 = vmatpush.msra.mxu0 0.0
    %397 = vmatpush.msra.mxu0 0.0
    %398 = vmatpush.msra.mxu0 %v218
    %399 = vmatpush.msra.mxu0 %v217
    %400 = vmatpush.msra.mxu0 %v216
    %401 = vmatpush.msra.mxu0 %v215
    %402 = vmatmul.f32.gmra.mxu0 %v384
    %v403 = vpop.f32.mrf.mxu0
    %v404 = vadd.f32 0.0, %v403
    %405 = vdwg.mxu0
    %v406 = vadd.f32 %v206, %v404
    %v407 = vtanh.pop %v406
    %vm408 = vcmp.gt.s32.totalorder %v214, 5
    %v409 = vsel %vm408, 1, 0
    %410 = vset.pattern.permute.xlu0 0
    %411 = vperm.xlu0 %410, %v409
    %v412 = vpop.permute.xlu0 %411
    %vm413 = vcmp.eq.s32.totalorder %v412, 1
    %v414 = vsel %vm413, %v407, 0.0
    %v415 = vmax.f32 %v382, %v414
    %v417 = vsel %vm148, %v407, 0
    %419 = vmatpush.msra.mxu0 0.0
    %420 = vmatpush.msra.mxu0 0.0
    %421 = vmatpush.msra.mxu0 0.0
    %422 = vmatpush.msra.mxu0 0.0
    %423 = vmatpush.msra.mxu0 0.0
    %424 = vmatpush.msra.mxu0 0.0
    %425 = vmatpush.msra.mxu0 0.0
    %426 = vmatpush.msra.mxu0 0.0
    %427 = vmatpush.msra.mxu0 0.0
    %428 = vmatpush.msra.mxu0 0.0
    %429 = vmatpush.msra.mxu0 0.0
    %430 = vmatpush.msra.mxu0 0.0
    %431 = vmatpush.msra.mxu0 %v218
    %432 = vmatpush.msra.mxu0 %v217
    %433 = vmatpush.msra.mxu0 %v216
    %434 = vmatpush.msra.mxu0 %v215
    %435 = vmatmul.f32.gmra.mxu0 %v417
    %v436 = vpop.f32.mrf.mxu0
    %v437 = vadd.f32 0.0, %v436
    %438 = vdwg.mxu0
    %v439 = vadd.f32 %v209, %v437
    %v440 = vtanh.pop %v439
    %vm441 = vcmp.gt.s32.totalorder %v214, 6
    %v442 = vsel %vm441, 1, 0
    %443 = vset.pattern.permute.xlu0 0
    %444 = vperm.xlu0 %443, %v442
    %v445 = vpop.permute.xlu0 %444
    %vm446 = vcmp.eq.s32.totalorder %v445, 1
    %v447 = vsel %vm446, %v440, 0.0
    %v448 = vmax.f32 %v415, %v447
    %v450 = vsel %vm148, %v440, 0
    %452 = vmatpush.msra.mxu0 0.0
    %453 = vmatpush.msra.mxu0 0.0
    %454 = vmatpush.msra.mxu0 0.0
    %455 = vmatpush.msra.mxu0 0.0
    %456 = vmatpush.msra.mxu0 0.0
    %457 = vmatpush.msra.mxu0 0.0
    %458 = vmatpush.msra.mxu0 0.0
    %459 = vmatpush.msra.mxu0 0.0
    %460 = vmatpush.msra.mxu0 0.0
    %461 = vmatpush.msra.mxu0 0.0
    %462 = vmatpush.msra.mxu0 0.0
    %463 = vmatpush.msra.mxu0 0.0
    %464 = vmatpush.msra.mxu0 %v218
    %465 = vmatpush.msra.mxu0 %v217
    %466 = vmatpush.msra.mxu0 %v216
    %467 = vmatpush.msra.mxu0 %v215
    %468 = vmatmul.f32.gmra.mxu0 %v450
    %v469 = vpop.f32.mrf.mxu0
    %v470 = vadd.f32 0.0, %v469
    %471 = vdwg.mxu0
    %v472 = vadd.f32 %v212, %v470
    %v473 = vtanh.pop %v472
    %vm474 = vcmp.gt.s32.totalorder %v214, 7
    %v475 = vsel %vm474, 1, 0
    %476 = vset.pattern.permute.xlu0 0
    %477 = vperm.xlu0 %476, %v475
    %v478 = vpop.permute.xlu0 %477
    %vm479 = vcmp.eq.s32.totalorder %v478, 1
    %v480 = vsel %vm479, %v473, 0.0
    %v481 = vmax.f32 %v448, %v480
    %v482 = vld [vmem:[#allocation7] sm:$0xff]
    %v483 = vld [vmem:[#allocation7 + $0x8] sm:$0xff]
    %v484 = vld [vmem:[#allocation7 + $0x10] sm:$0xff]
    %v485 = vld [vmem:[#allocation7 + $0x18] sm:$0xff]
    %v486 = vld [vmem:[%s6] sm:$0x1]
    %v488 = vperm.slane %v486, 0
    %v491 = vsel %vm148, %v481, 0
    %493 = vmatpush.msra.mxu0 0.0
    %494 = vmatpush.msra.mxu0 0.0
    %495 = vmatpush.msra.mxu0 0.0
    %496 = vmatpush.msra.mxu0 0.0
    %497 = vmatpush.msra.mxu0 0.0
    %498 = vmatpush.msra.mxu0 0.0
    %499 = vmatpush.msra.mxu0 0.0
    %500 = vmatpush.msra.mxu0 0.0
    %501 = vmatpush.msra.mxu0 0.0
    %502 = vmatpush.msra.mxu0 0.0
    %503 = vmatpush.msra.mxu0 0.0
    %504 = vmatpush.msra.mxu0 0.0
    %505 = vmatpush.msra.mxu0 %v485
    %506 = vmatpush.msra.mxu0 %v484
    %507 = vmatpush.msra.mxu0 %v483
    %508 = vmatpush.msra.mxu0 %v482
    %509 = vmatmul.f32.gmra.mxu0 %v491
    %v510 = vpop.f32.mrf.mxu0
    %v511 = vadd.f32 %v488, %v510
    %512 = vdwg.mxu0
    %v513 = vtanh.pop %v511
    %v514 = vld [vmem:[#allocation9] sm:$0xff]
    %v515 = vld [vmem:[#allocation9 + $0x8] sm:$0xff]
    %v516 = vld [vmem:[#allocation9 + $0x10] sm:$0xff]
    %v517 = vld [vmem:[#allocation9 + $0x18] sm:$0xff]
    %v518 = vld [vmem:[#allocation9 + $0x20] sm:$0xff]
    %v519 = vld [vmem:[#allocation9 + $0x28] sm:$0xff]
    %v520 = vld [vmem:[#allocation9 + $0x30] sm:$0xff]
    %v521 = vld [vmem:[#allocation9 + $0x38] sm:$0xff]
    %v522 = vld [vmem:[%s8] sm:$0x1]
    %v524 = vperm.slane %v522, 0
    %vm526 = vcmask 523264
    %v528 = vsel %vm526, %v513, 0
    %530 = vmatpush.msra.mxu0 0.0
    %531 = vmatpush.msra.mxu0 0.0
    %532 = vmatpush.msra.mxu0 0.0
    %533 = vmatpush.msra.mxu0 0.0
    %534 = vmatpush.msra.mxu0 0.0
    %535 = vmatpush.msra.mxu0 0.0
    %536 = vmatpush.msra.mxu0 0.0
    %537 = vmatpush.msra.mxu0 0.0
    %538 = vmatpush.msra.mxu0 %v521
    %539 = vmatpush.msra.mxu0 %v520
    %540 = vmatpush.msra.mxu0 %v519
    %541 = vmatpush.msra.mxu0 %v518
    %542 = vmatpush.msra.mxu0 %v517
    %543 = vmatpush.msra.mxu0 %v516
    %544 = vmatpush.msra.mxu0 %v515
    %545 = vmatpush.msra.mxu0 %v514
    %546 = vmatmul.f32.gmra.mxu0 %v528
    %v547 = vpop.f32.mrf.mxu0
    %v548 = vadd.f32 %v524, %v547
    %549 = vdwg.mxu0
    %v550 = vtanh.pop %v548
    %v551 = vld [vmem:[#allocation10] sm:$0xff]
    %v552 = vld [vmem:[#allocation10 + $0x8] sm:$0xff]
    %v553 = vld [vmem:[#allocation10 + $0x10] sm:$0xff]
    %v554 = vld [vmem:[#allocation10 + $0x18] sm:$0xff]
    %v555 = vld [vmem:[#allocation10 + $0x20] sm:$0xff]
    %v556 = vld [vmem:[#allocation10 + $0x28] sm:$0xff]
    %v557 = vld [vmem:[#allocation10 + $0x30] sm:$0xff]
    %v558 = vld [vmem:[#allocation10 + $0x38] sm:$0xff]
    %v559 = vld [vmem:[%s10] sm:$0x1]
    %v561 = vperm.slane %v559, 0
    %v564 = vsel %vm526, %v550, 0
    %566 = vmatpush.msra.mxu0 0.0
    %567 = vmatpush.msra.mxu0 0.0
    %568 = vmatpush.msra.mxu0 0.0
    %569 = vmatpush.msra.mxu0 0.0
    %570 = vmatpush.msra.mxu0 0.0
    %571 = vmatpush.msra.mxu0 0.0
    %572 = vmatpush.msra.mxu0 0.0
    %573 = vmatpush.msra.mxu0 0.0
    %574 = vmatpush.msra.mxu0 %v558
    %575 = vmatpush.msra.mxu0 %v557
    %576 = vmatpush.msra.mxu0 %v556
    %577 = vmatpush.msra.mxu0 %v555
    %578 = vmatpush.msra.mxu0 %v554
    %579 = vmatpush.msra.mxu0 %v553
    %580 = vmatpush.msra.mxu0 %v552
    %581 = vmatpush.msra.mxu0 %v551
    %582 = vmatmul.f32.gmra.mxu0 %v564
    %v583 = vpop.f32.mrf.mxu0
    %v584 = vadd.f32 %v561, %v583
    %585 = vdwg.mxu0
    %586 = vst [vmem:[%s11] sm:$0xff] %v584
    // Predicated region
    $region70: #{rnn_module_forward.1} parent=1 // pred_check
      _
    $region71: #{rnn_module_forward.1} parent=1 // pred_check_branch
      %588 = sbr.rel (0) target = $region73
    $region72: #{rnn_module_forward.1} parent=1 // pred_region
      _
    $region73: #{rnn_module_forward.1} parent=1 // pred_fallthru
      _
    // Predicated region
    $region74: #{rnn_module_forward.1} parent=1 // pred_check
      _
    $region75: #{rnn_module_forward.1} parent=1 // pred_check_branch
      %590 = sbr.rel (0) target = $region77
    $region76: #{rnn_module_forward.1} parent=1 // pred_region
      _
    $region77: #{rnn_module_forward.1} parent=1 // pred_fallthru
      _
    %591 = vsyncpa [#allocation3], 1
    %592 = vsyncpa [#allocation5], 1
    %593 = vsyncpa [#allocation8], 1
    %594 = vsyncpa [#allocation11], 1

</llo_original>
